<compile_context>
chip_gen: v7x
topology: tpu7x:2x2x1
jax: 0.10.0
libtpu: 0.0.40
codegen_flags: <defaults>
</compile_context>

<pallas_src>
import functools
import math

import jax
import jax.numpy as jnp
from jax.experimental import pallas as pl
from jax.experimental.pallas import tpu as pltpu


def _round_up(v, m):
    return ((v + m - 1) // m) * m


def _project_kernel(x_ref, w_ref, b_ref, o_ref, *, add_bias):
    """One row-tile of h0 = x @ W (+ bias only when n_hop == 0)."""
    acc = jnp.dot(x_ref[...], w_ref[...], preferred_element_type=jnp.float32)
    if add_bias:
        acc = acc + b_ref[...]
    o_ref[...] = acc.astype(o_ref.dtype)


def _propagate_kernel(adj_ref, h0_ref, b_ref, o_ref, hbuf_ref, acc_ref, *,
                      n_hop):
    """grid = (n_hop, M_tiles, K_tiles):  h_{t+1} = adj @ h_t, out = h_n + b.

    adj is streamed (tm, tk) tile by tile; per-hop features live in a
    resident VMEM ping-pong buffer hbuf[(2, N_pad, F_pad)]:
      read slot = (hop + 1) % 2, write slot = hop % 2.
    """
    hop = pl.program_id(0)
    i = pl.program_id(1)
    k = pl.program_id(2)
    n_k = pl.num_programs(2)
    tm, tk = adj_ref.shape

    # Load the projected features into the hop-0 read slot once.
    @pl.when((hop == 0) & (i == 0) & (k == 0))
    def _():
        hbuf_ref[1, :, :] = h0_ref[...].astype(hbuf_ref.dtype)

    # Zero the K accumulator at the start of each (hop, row-tile).
    @pl.when(k == 0)
    def _():
        acc_ref[...] = jnp.zeros_like(acc_ref)

    src_slot = (hop + 1) % 2
    src = hbuf_ref[src_slot, pl.ds(pl.multiple_of(k * tk, tk), tk), :]
    acc_ref[...] += jnp.dot(adj_ref[...], src,
                            preferred_element_type=jnp.float32)

    # End of the K reduction: publish this row tile for the next hop.
    @pl.when(k == n_k - 1)
    def _():
        dst_slot = hop % 2
        hbuf_ref[dst_slot, pl.ds(pl.multiple_of(i * tm, tm), tm), :] = (
            acc_ref[...].astype(hbuf_ref.dtype))

    # Last hop: add bias and emit the (lane-dense, f32) output tile.
    @pl.when((k == n_k - 1) & (hop == n_hop - 1))
    def _():
        o_ref[...] = (acc_ref[...] + b_ref[...]).astype(o_ref.dtype)


def homo_gcn(x, adj, weight, bias, n_hop, *, tile=None):
    """Pallas implementation of HomoGCN.forward (dense adjacency)."""
    N, f_in = x.shape
    f_out = weight.shape[1]

    # Lane-dense padding: features -> multiple of 128; rows -> multiple of
    # the row/K tile (256 is MXU-native on v6e/v7x; 128 also fine on v5e).
    fin_p = _round_up(f_in, 128)
    fout_p = _round_up(f_out, 128)
    if tile is None:
        tile = min(256, _round_up(N, 128))
    n_p = _round_up(N, tile)
    tm = tk = tile
    m_tiles = n_p // tm
    k_tiles = n_p // tk

    cdt = jnp.bfloat16  # MXU compute dtype; accumulation stays f32
    x_p = jnp.zeros((n_p, fin_p), cdt).at[:N, :f_in].set(x.astype(cdt))
    adj_p = jnp.zeros((n_p, n_p), cdt).at[:N, :N].set(adj.astype(cdt))
    w_p = jnp.zeros((fin_p, fout_p), cdt).at[:f_in, :f_out].set(
        weight.astype(cdt))
    b_p = jnp.zeros((1, fout_p), jnp.float32).at[0, :f_out].set(
        bias.astype(jnp.float32))

    # ---- 1) feature projection: h0 = x @ W ------------------------------
    h0_dtype = jnp.float32 if n_hop == 0 else jnp.bfloat16
    h0 = pl.pallas_call(
        functools.partial(_project_kernel, add_bias=(n_hop == 0)),
        out_shape=jax.ShapeDtypeStruct((n_p, fout_p), h0_dtype),
        grid_spec=pltpu.PrefetchScalarGridSpec(
            num_scalar_prefetch=0,
            grid=(m_tiles,),
            in_specs=[
                pl.BlockSpec((tm, fin_p), lambda i: (i, 0)),
                pl.BlockSpec((fin_p, fout_p), lambda i: (0, 0)),
                pl.BlockSpec((1, fout_p), lambda i: (0, 0)),
            ],
            out_specs=pl.BlockSpec((tm, fout_p), lambda i: (i, 0)),
        ),
        compiler_params=pltpu.CompilerParams(
            dimension_semantics=("parallel",)),
    )(x_p, w_p, b_p)

    if n_hop == 0:
        return h0[:N, :f_out]

    # ---- 2) n_hop propagation steps + bias, adj streamed in tiles --------
    # VMEM budget (double-buffered adj tiles + resident h + scratch) with 2x
    # slack; set explicitly because v5e's default scoped limit is 16 MiB, and
    # capped below v7x's 64 MiB physical VMEM.
    need = (2 * tm * tk * 2          # adj tiles (bf16, double-buffered)
            + 2 * n_p * fout_p * 2   # resident h0 input
            + 2 * n_p * fout_p * 2   # ping-pong h scratch
            + tm * fout_p * 4        # f32 K accumulator
            + 2 * tm * fout_p * 4    # output tile (f32, double-buffered)
            + 2 * fout_p * 4)        # bias
    vmem_limit = min(60 * 1024 * 1024, 2 * need + (8 << 20))

    out_p = pl.pallas_call(
        functools.partial(_propagate_kernel, n_hop=n_hop),
        out_shape=jax.ShapeDtypeStruct((n_p, fout_p), jnp.float32),
        grid_spec=pltpu.PrefetchScalarGridSpec(
            num_scalar_prefetch=0,
            grid=(n_hop, m_tiles, k_tiles),
            in_specs=[
                pl.BlockSpec((tm, tk), lambda h, i, k: (i, k)),       # adj
                pl.BlockSpec((n_p, fout_p), lambda h, i, k: (0, 0)),  # h0
                pl.BlockSpec((1, fout_p), lambda h, i, k: (0, 0)),    # bias
            ],
            out_specs=pl.BlockSpec((tm, fout_p), lambda h, i, k: (i, 0)),
            scratch_shapes=[
                pltpu.VMEM((2, n_p, fout_p), jnp.bfloat16),  # h ping-pong
                pltpu.VMEM((tm, fout_p), jnp.float32),       # K accumulator
            ],
        ),
        # All axes "arbitrary": each hop depends on every row tile of the
        # previous hop via the resident scratch, so megacore sharding of the
        # row axis would be unsafe.
        compiler_params=pltpu.CompilerParams(
            dimension_semantics=("arbitrary", "arbitrary", "arbitrary"),
            vmem_limit_bytes=vmem_limit),
    )(adj_p, h0, b_p)

    return out_p[:N, :f_out]


def homo_gcn_ref(x, adj, weight, bias, n_hop):
    h = x
    for _ in range(n_hop):
        h = adj @ h
    return h @ weight + bias[None, :]


if __name__ == "__main__":
    N, in_features, out_features, n_hop = 64, 32, 16, 2

    key = jax.random.PRNGKey(0)
    k_x, k_adj, k_w, k_b = jax.random.split(key, 4)

    x = jax.random.normal(k_x, (N, in_features), dtype=jnp.float32)

    # Row-normalized random adjacency (dense) with self loops.
    adj_raw = (jax.random.uniform(k_adj, (N, N)) > 0.8).astype(jnp.float32)
    adj_raw = adj_raw + jnp.eye(N, dtype=jnp.float32)
    adj = adj_raw / jnp.sum(adj_raw, axis=1, keepdims=True)

    # Parameter init mirroring reset_parameters(): uniform(-stdv, stdv).
    stdv = 1.0 / math.sqrt(out_features)
    weight = jax.random.uniform(k_w, (in_features, out_features),
                                minval=-stdv, maxval=stdv, dtype=jnp.float32)
    bias = jax.random.uniform(k_b, (out_features,), minval=-stdv, maxval=stdv,
                              dtype=jnp.float32)

    out = homo_gcn(x, adj, weight, bias, n_hop)
    out = jax.block_until_ready(out)

    ref = homo_gcn_ref(x, adj, weight, bias, n_hop)
    assert out.shape == (N, out_features)
    # bf16 inputs with f32 accumulation -> loosen tolerance vs the f32 ref.
    assert jnp.allclose(out, ref, atol=5e-2, rtol=5e-2), "mismatch vs reference"

    print("KERNEL_OK")
</pallas_src>

<mosaic_0001>
module attributes {stable_mosaic.version = 11 : i64} {
  func.func @_project_kernel(%arg0: i32, %arg1: memref<128x128xbf16, #tpu.memory_space<vmem>>, %arg2: memref<128x128xbf16, #tpu.memory_space<vmem>>, %arg3: memref<1x128xf32, #tpu.memory_space<vmem>>, %arg4: memref<128x128xbf16, #tpu.memory_space<vmem>>) attributes {dimension_semantics = [#tpu.dimension_semantics<parallel>], iteration_bounds = array<i64: 1>, scalar_prefetch = 0 : i64, scratch_operands = 0 : i64, tpu.core_type = #tpu.core_type<tc>, window_params = [{transform_indices = @transform_0, window_bounds = array<i64: 128, 128>}, {pipeline_mode = #tpu.pipeline_mode<synchronous>, transform_indices = @transform_1, window_bounds = array<i64: 128, 128>}, {pipeline_mode = #tpu.pipeline_mode<synchronous>, transform_indices = @transform_2, window_bounds = array<i64: 1, 128>}, {transform_indices = @transform_3, window_bounds = array<i64: 128, 128>}]} {
    %c0 = arith.constant 0 : index
    %c0_0 = arith.constant 0 : index
    %0 = vector.load %arg1[%c0, %c0_0] : memref<128x128xbf16, #tpu.memory_space<vmem>>, vector<128x128xbf16>
    %c0_1 = arith.constant 0 : index
    %c0_2 = arith.constant 0 : index
    %1 = vector.load %arg2[%c0_1, %c0_2] : memref<128x128xbf16, #tpu.memory_space<vmem>>, vector<128x128xbf16>
    %cst = arith.constant dense<0.000000e+00> : vector<128x128xf32>
    %2 = tpu.matmul %0, %1, %cst {dimension_numbers = #tpu.dot_dimension_numbers<[1], [0], [0], [1], [0, 0, 1, 1], [], []>} : vector<128x128xbf16>, vector<128x128xbf16>, vector<128x128xf32> -> vector<128x128xf32>
    %3 = arith.truncf %2 : vector<128x128xf32> to vector<128x128xbf16>
    %c0_3 = arith.constant 0 : index
    %c0_4 = arith.constant 0 : index
    %4 = vector.load %arg4[%c0_3, %c0_4] : memref<128x128xbf16, #tpu.memory_space<vmem>>, vector<128x128xbf16>
    tpu.vector_store %arg4[%c0_3, %c0_4], %3 {strides = array<i32>} : memref<128x128xbf16, #tpu.memory_space<vmem>>, vector<128x128xbf16>,
    return
  }
  func.func @transform_0(%arg0: i32) -> (i32, i32) {
    %c0_i32 = arith.constant 0 : i32
    %c0_i32_0 = arith.constant 0 : i32
    return %arg0, %c0_i32 : i32, i32
  }
  func.func @transform_1(%arg0: i32) -> (i32, i32) {
    %c0_i32 = arith.constant 0 : i32
    %c0_i32_0 = arith.constant 0 : i32
    %c0_i32_1 = arith.constant 0 : i32
    return %c0_i32, %c0_i32_0 : i32, i32
  }
  func.func @transform_2(%arg0: i32) -> (i32, i32) {
    %c0_i32 = arith.constant 0 : i32
    %c0_i32_0 = arith.constant 0 : i32
    %c0_i32_1 = arith.constant 0 : i32
    return %c0_i32, %c0_i32_0 : i32, i32
  }
  func.func @transform_3(%arg0: i32) -> (i32, i32) {
    %c0_i32 = arith.constant 0 : i32
    %c0_i32_0 = arith.constant 0 : i32
    return %arg0, %c0_i32 : i32, i32
  }
}

</mosaic_0001>

<llo_original>
// kernel: tpu_custom_call.1
$region0: #{tpu_custom_call.1}
  #allocation0 [shape = 'u32[]', space=smem, size = 0x4, offset = 0x4, fixed_abs, tag = 'smem constant byte address 0x4 - core index']
  #allocation1 [shape = 'u32[144,128]{1,0:T(1,128)}', space=vmem, size = 0x12000, scoped, tag = 'internal scratch']
  %s0 = inlined_call_operand.hbm [shape: bf16[128,128], index: 0, kind: input, shape index: {}]
  %s1 = inlined_call_operand.hbm [shape: bf16[128,128], index: 1, kind: input, shape index: {}]
  %s2 = inlined_call_operand.vmem [shape: f32[1,128], index: 2, kind: input, shape index: {}]
  %s3 = inlined_call_operand.hbm [shape: bf16[128,128], index: 3, kind: output, shape index: {}]
  %s4 = sld [smem:[#allocation0]]
  $region30: #{tpu_custom_call.1} parent=0
    _
  %s6 = ssub.s32 1, %s4
  %s7 = scalar_select 0, %s6, %s4
  $region1: #{tpu_custom_call.1} parent=0
    #allocation2 [shape = 'u8[32768]{0}', space=vmem, size = 0x8000, scoped, tag = 'input window, operand 0, single buffered']
    #allocation3 [shape = 's32[1]{0}', space=sflag, size = 0x4, scoped, tag = 'scoped memory for tpu_custom_call.1']
    #allocation4 [shape = 's32[1]{0}', space=sflag, size = 0x4, scoped, tag = 'scoped memory for tpu_custom_call.1']
    #allocation5 [shape = 'u8[32768]{0}', space=vmem, size = 0x8000, scoped, tag = 'input window, operand 1, single buffered']
    #allocation6 [shape = 's32[1]{0}', space=sflag, size = 0x4, scoped, tag = 'scoped memory for tpu_custom_call.1']
    #allocation7 [shape = 'u8[32768]{0}', space=vmem, size = 0x8000, scoped, tag = 'output window, operand 0, single buffered']
    %8 = vsyncpa [#allocation3], 0
    %9 = vsyncpa [#allocation6], 0
    %10 = vsyncpa [#allocation4], 0
    // Predicated region
    $region2: #{tpu_custom_call.1} parent=1 // pred_check
      _
    $region3: #{tpu_custom_call.1} parent=1 // pred_check_branch
      %12 = sbr.rel (0) target = $region5
    $region4: #{tpu_custom_call.1} parent=1 // pred_region
      %s14 = ssub.s32 1024, 1024
      %15 = vsyncadd [#allocation3], %s14
      %s16 = sshll.u32 [#allocation2], 4
      %s17 = int_to_ptr.vmem [resolvable:$true] %s16
      %22 = dma.hbm_to_vmem [thread:$0]  %s0, 1024, %s17, [#allocation3], 64, 64, 4
    $region5: #{tpu_custom_call.1} parent=1 // pred_fallthru
      _
    // Predicated region
    $region6: #{tpu_custom_call.1} parent=1 // pred_check
      _
    $region7: #{tpu_custom_call.1} parent=1 // pred_check_branch
      %24 = sbr.rel (0) target = $region9
    $region8: #{tpu_custom_call.1} parent=1 // pred_region
      %s26 = ssub.s32 1024, 1024
      %27 = vsyncadd [#allocation6], %s26
      %s28 = sshll.u32 [#allocation5], 4
      %s29 = int_to_ptr.vmem [resolvable:$true] %s28
      %34 = dma.hbm_to_vmem [thread:$0]  %s1, 1024, %s29, [#allocation6], 64, 64, 4
    $region9: #{tpu_custom_call.1} parent=1 // pred_fallthru
      _
    // Predicated region
    $region10: #{tpu_custom_call.1} parent=1 // pred_check
      _
    $region11: #{tpu_custom_call.1} parent=1 // pred_check_branch
      %36 = sbr.rel (0) target = $region13
    $region12: #{tpu_custom_call.1} parent=1 // pred_region
      _
    $region13: #{tpu_custom_call.1} parent=1 // pred_fallthru
      _
    // Predicated region
    $region14: #{tpu_custom_call.1} parent=1 // pred_check
      _
    $region15: #{tpu_custom_call.1} parent=1 // pred_check_branch
      %38 = sbr.rel (0) target = $region17
    $region16: #{tpu_custom_call.1} parent=1 // pred_region
      %39 = dma.done [#allocation3], 1024
    $region17: #{tpu_custom_call.1} parent=1 // pred_fallthru
      _
    // Predicated region
    $region18: #{tpu_custom_call.1} parent=1 // pred_check
      _
    $region19: #{tpu_custom_call.1} parent=1 // pred_check_branch
      %41 = sbr.rel (0) target = $region21
    $region20: #{tpu_custom_call.1} parent=1 // pred_region
      %42 = dma.done [#allocation6], 1024
    $region21: #{tpu_custom_call.1} parent=1 // pred_fallthru
      _
    %v44 = vld [vmem:[#allocation2] sm:$0xf]
    %v45 = vld [vmem:[#allocation2 + $0x4] sm:$0xf]
    %v46 = vld [vmem:[#allocation2 + $0x8] sm:$0xf]
    %v47 = vld [vmem:[#allocation2 + $0xc] sm:$0xf]
    %v48 = vld [vmem:[#allocation2 + $0x10] sm:$0xf]
    %v49 = vld [vmem:[#allocation2 + $0x14] sm:$0xf]
    %v50 = vld [vmem:[#allocation2 + $0x18] sm:$0xf]
    %v51 = vld [vmem:[#allocation2 + $0x1c] sm:$0xf]
    %v52 = vld [vmem:[#allocation2 + $0x20] sm:$0xf]
    %v53 = vld [vmem:[#allocation2 + $0x24] sm:$0xf]
    %v54 = vld [vmem:[#allocation2 + $0x28] sm:$0xf]
    %v55 = vld [vmem:[#allocation2 + $0x2c] sm:$0xf]
    %v56 = vld [vmem:[#allocation2 + $0x30] sm:$0xf]
    %v57 = vld [vmem:[#allocation2 + $0x34] sm:$0xf]
    %v58 = vld [vmem:[#allocation2 + $0x38] sm:$0xf]
    %v59 = vld [vmem:[#allocation2 + $0x3c] sm:$0xf]
    %v60 = vld [vmem:[#allocation5] sm:$0xf]
    %v61 = vld [vmem:[#allocation5 + $0x4] sm:$0xf]
    %v62 = vld [vmem:[#allocation5 + $0x8] sm:$0xf]
    %v63 = vld [vmem:[#allocation5 + $0xc] sm:$0xf]
    %v64 = vld [vmem:[#allocation5 + $0x10] sm:$0xf]
    %v65 = vld [vmem:[#allocation5 + $0x14] sm:$0xf]
    %v66 = vld [vmem:[#allocation5 + $0x18] sm:$0xf]
    %v67 = vld [vmem:[#allocation5 + $0x1c] sm:$0xf]
    %v68 = vld [vmem:[#allocation5 + $0x20] sm:$0xf]
    %v69 = vld [vmem:[#allocation5 + $0x24] sm:$0xf]
    %v70 = vld [vmem:[#allocation5 + $0x28] sm:$0xf]
    %v71 = vld [vmem:[#allocation5 + $0x2c] sm:$0xf]
    %v72 = vld [vmem:[#allocation5 + $0x30] sm:$0xf]
    %v73 = vld [vmem:[#allocation5 + $0x34] sm:$0xf]
    %v74 = vld [vmem:[#allocation5 + $0x38] sm:$0xf]
    %v75 = vld [vmem:[#allocation5 + $0x3c] sm:$0xf]
    %v92 = vunpack.c.l.b16 %v44
    %v93 = vunpack.c.l.b16 %v45
    %v94 = vunpack.c.l.b16 %v46
    %v95 = vunpack.c.l.b16 %v47
    %v96 = vunpack.c.l.b16 %v48
    %v97 = vunpack.c.l.b16 %v49
    %v98 = vunpack.c.l.b16 %v50
    %v99 = vunpack.c.l.b16 %v51
    %v100 = vunpack.c.l.b16 %v52
    %v101 = vunpack.c.l.b16 %v53
    %v102 = vunpack.c.l.b16 %v54
    %v103 = vunpack.c.l.b16 %v55
    %v104 = vunpack.c.l.b16 %v56
    %v105 = vunpack.c.l.b16 %v57
    %v106 = vunpack.c.l.b16 %v58
    %v107 = vunpack.c.l.b16 %v59
    %v108 = vpack.c.b16 %v93, %v92
    %v109 = vpack.c.b16 %v95, %v94
    %v110 = vpack.c.b16 %v97, %v96
    %v111 = vpack.c.b16 %v99, %v98
    %v112 = vpack.c.b16 %v101, %v100
    %v113 = vpack.c.b16 %v103, %v102
    %v114 = vpack.c.b16 %v105, %v104
    %v115 = vpack.c.b16 %v107, %v106
    %v140 = vunpack.c.l.b16 %v60
    %v141 = vunpack.c.l.b16 %v61
    %v142 = vunpack.c.l.b16 %v62
    %v143 = vunpack.c.l.b16 %v63
    %v144 = vunpack.c.l.b16 %v64
    %v145 = vunpack.c.l.b16 %v65
    %v146 = vunpack.c.l.b16 %v66
    %v147 = vunpack.c.l.b16 %v67
    %v148 = vunpack.c.l.b16 %v68
    %v149 = vunpack.c.l.b16 %v69
    %v150 = vunpack.c.l.b16 %v70
    %v151 = vunpack.c.l.b16 %v71
    %v152 = vunpack.c.l.b16 %v72
    %v153 = vunpack.c.l.b16 %v73
    %v154 = vunpack.c.l.b16 %v74
    %v155 = vunpack.c.l.b16 %v75
    %v156 = vpack.c.b16 %v141, %v140
    %v157 = vpack.c.b16 %v143, %v142
    %v158 = vpack.c.b16 %v145, %v144
    %v159 = vpack.c.b16 %v147, %v146
    %v160 = vpack.c.b16 %v149, %v148
    %v161 = vpack.c.b16 %v151, %v150
    %v162 = vpack.c.b16 %v153, %v152
    %v163 = vpack.c.b16 %v155, %v154
    %172 = vmatprep.subr.bf16.mxu0 0
    %173 = vmatpush1.bf16.msra.mxu0 %v156
    %174 = vmatprep.subr.bf16.mxu0 0
    %175 = vmatpush1.bf16.msra.mxu0 %v157
    %176 = vmatprep.subr.bf16.mxu0 0
    %177 = vmatpush1.bf16.msra.mxu0 %v158
    %178 = vmatprep.subr.bf16.mxu0 0
    %179 = vmatpush1.bf16.msra.mxu0 %v159
    %180 = vmatprep.subr.bf16.mxu0 0
    %181 = vmatpush1.bf16.msra.mxu0 %v160
    %182 = vmatprep.subr.bf16.mxu0 0
    %183 = vmatpush1.bf16.msra.mxu0 %v161
    %184 = vmatprep.subr.bf16.mxu0 0
    %185 = vmatpush1.bf16.msra.mxu0 %v162
    %186 = vmatprep.subr.bf16.mxu0 0
    %187 = vmatpush1.bf16.msra.mxu0 %v163
    %188 = vmatprep.subr.bf16.mxu0 0
    %189 = vmatpush1.bf16.msra.mxu0 0
    %190 = vmatprep.subr.bf16.mxu0 0
    %191 = vmatpush1.bf16.msra.mxu0 0
    %192 = vmatprep.subr.bf16.mxu0 0
    %193 = vmatpush1.bf16.msra.mxu0 0
    %194 = vmatprep.subr.bf16.mxu0 0
    %195 = vmatpush1.bf16.msra.mxu0 0
    %196 = vmatprep.subr.bf16.mxu0 0
    %197 = vmatpush1.bf16.msra.mxu0 0
    %198 = vmatprep.subr.bf16.mxu0 0
    %199 = vmatpush1.bf16.msra.mxu0 0
    %200 = vmatprep.subr.bf16.mxu0 0
    %201 = vmatpush1.bf16.msra.mxu0 0
    %202 = vmatprep.subr.bf16.mxu0 0
    %203 = vmatpush1.bf16.msra.mxu0 0
    %204 = vmatprep.mubr.bf16.mxu0 0
    %205 = vmatmul.mubr.bf16.gmra.mrb[0].mxu0 %v108
    %v206 = vpop.f32.mrb[0].mxu0
    %v207 = vadd.f32 0.0, %v206
    %v208 = vpop.f32.mrb[0].mxu0
    %v209 = vpop.f32.mrb[0].mxu0
    %v210 = vadd.f32 0.0, %v209
    %v211 = vpop.f32.mrb[0].mxu0
    %212 = vmatprep.mubr.bf16.mxu0 0
    %213 = vmatmul.mubr.bf16.gmra.mrb[0].mxu0 %v109
    %v214 = vpop.f32.mrb[0].mxu0
    %v215 = vadd.f32 0.0, %v214
    %v216 = vpop.f32.mrb[0].mxu0
    %v217 = vpop.f32.mrb[0].mxu0
    %v218 = vadd.f32 0.0, %v217
    %v219 = vpop.f32.mrb[0].mxu0
    %220 = vmatprep.mubr.bf16.mxu0 0
    %221 = vmatmul.mubr.bf16.gmra.mrb[0].mxu0 %v110
    %v222 = vpop.f32.mrb[0].mxu0
    %v223 = vadd.f32 0.0, %v222
    %v224 = vpop.f32.mrb[0].mxu0
    %v225 = vpop.f32.mrb[0].mxu0
    %v226 = vadd.f32 0.0, %v225
    %v227 = vpop.f32.mrb[0].mxu0
    %228 = vmatprep.mubr.bf16.mxu0 0
    %229 = vmatmul.mubr.bf16.gmra.mrb[0].mxu0 %v111
    %v230 = vpop.f32.mrb[0].mxu0
    %v231 = vadd.f32 0.0, %v230
    %v232 = vpop.f32.mrb[0].mxu0
    %v233 = vpop.f32.mrb[0].mxu0
    %v234 = vadd.f32 0.0, %v233
    %v235 = vpop.f32.mrb[0].mxu0
    %236 = vmatprep.mubr.bf16.mxu0 0
    %237 = vmatmul.mubr.bf16.gmra.mrb[0].mxu0 %v112
    %v238 = vpop.f32.mrb[0].mxu0
    %v239 = vadd.f32 0.0, %v238
    %v240 = vpop.f32.mrb[0].mxu0
    %v241 = vpop.f32.mrb[0].mxu0
    %v242 = vadd.f32 0.0, %v241
    %v243 = vpop.f32.mrb[0].mxu0
    %244 = vmatprep.mubr.bf16.mxu0 0
    %245 = vmatmul.mubr.bf16.gmra.mrb[0].mxu0 %v113
    %v246 = vpop.f32.mrb[0].mxu0
    %v247 = vadd.f32 0.0, %v246
    %v248 = vpop.f32.mrb[0].mxu0
    %v249 = vpop.f32.mrb[0].mxu0
    %v250 = vadd.f32 0.0, %v249
    %v251 = vpop.f32.mrb[0].mxu0
    %252 = vmatprep.mubr.bf16.mxu0 0
    %253 = vmatmul.mubr.bf16.gmra.mrb[0].mxu0 %v114
    %v254 = vpop.f32.mrb[0].mxu0
    %v255 = vadd.f32 0.0, %v254
    %v256 = vpop.f32.mrb[0].mxu0
    %v257 = vpop.f32.mrb[0].mxu0
    %v258 = vadd.f32 0.0, %v257
    %v259 = vpop.f32.mrb[0].mxu0
    %260 = vmatprep.mubr.bf16.mxu0 0
    %261 = vmatmul.mubr.bf16.gmra.mrb[0].mxu0 %v115
    %v262 = vpop.f32.mrb[0].mxu0
    %v263 = vadd.f32 0.0, %v262
    %v264 = vpop.f32.mrb[0].mxu0
    %v265 = vpop.f32.mrb[0].mxu0
    %v266 = vadd.f32 0.0, %v265
    %v267 = vpop.f32.mrb[0].mxu0
    %268 = vdwg.mxu0
    %v269 = vpack.c.bf16 %v210, %v207
    %v270 = vpack.c.bf16 %v218, %v215
    %v271 = vpack.c.bf16 %v226, %v223
    %v272 = vpack.c.bf16 %v234, %v231
    %v273 = vpack.c.bf16 %v242, %v239
    %v274 = vpack.c.bf16 %v250, %v247
    %v275 = vpack.c.bf16 %v258, %v255
    %v276 = vpack.c.bf16 %v266, %v263
    %v285 = vunpack.c.l.b16 %v269
    %v286 = vunpack.c.h.b16 %v269
    %v287 = vunpack.c.l.b16 %v270
    %v288 = vunpack.c.h.b16 %v270
    %v289 = vunpack.c.l.b16 %v271
    %v290 = vunpack.c.h.b16 %v271
    %v291 = vunpack.c.l.b16 %v272
    %v292 = vunpack.c.h.b16 %v272
    %v293 = vunpack.c.l.b16 %v273
    %v294 = vunpack.c.h.b16 %v273
    %v295 = vunpack.c.l.b16 %v274
    %v296 = vunpack.c.h.b16 %v274
    %v297 = vunpack.c.l.b16 %v275
    %v298 = vunpack.c.h.b16 %v275
    %v299 = vunpack.c.l.b16 %v276
    %v300 = vunpack.c.h.b16 %v276
    %v301 = vpack.c.b16 %v285, %v285
    %v302 = vpack.c.b16 %v286, %v286
    %v303 = vpack.c.b16 %v287, %v287
    %v304 = vpack.c.b16 %v288, %v288
    %v305 = vpack.c.b16 %v289, %v289
    %v306 = vpack.c.b16 %v290, %v290
    %v307 = vpack.c.b16 %v291, %v291
    %v308 = vpack.c.b16 %v292, %v292
    %v309 = vpack.c.b16 %v293, %v293
    %v310 = vpack.c.b16 %v294, %v294
    %v311 = vpack.c.b16 %v295, %v295
    %v312 = vpack.c.b16 %v296, %v296
    %v313 = vpack.c.b16 %v297, %v297
    %v314 = vpack.c.b16 %v298, %v298
    %v315 = vpack.c.b16 %v299, %v299
    %v316 = vpack.c.b16 %v300, %v300
    %333 = vst [vmem:[#allocation7] sm:$0xf] %v301
    %334 = vst [vmem:[#allocation7 + $0x4] sm:$0xf] %v302
    %335 = vst [vmem:[#allocation7 + $0x8] sm:$0xf] %v303
    %336 = vst [vmem:[#allocation7 + $0xc] sm:$0xf] %v304
    %337 = vst [vmem:[#allocation7 + $0x10] sm:$0xf] %v305
    %338 = vst [vmem:[#allocation7 + $0x14] sm:$0xf] %v306
    %339 = vst [vmem:[#allocation7 + $0x18] sm:$0xf] %v307
    %340 = vst [vmem:[#allocation7 + $0x1c] sm:$0xf] %v308
    %341 = vst [vmem:[#allocation7 + $0x20] sm:$0xf] %v309
    %342 = vst [vmem:[#allocation7 + $0x24] sm:$0xf] %v310
    %343 = vst [vmem:[#allocation7 + $0x28] sm:$0xf] %v311
    %344 = vst [vmem:[#allocation7 + $0x2c] sm:$0xf] %v312
    %345 = vst [vmem:[#allocation7 + $0x30] sm:$0xf] %v313
    %346 = vst [vmem:[#allocation7 + $0x34] sm:$0xf] %v314
    %347 = vst [vmem:[#allocation7 + $0x38] sm:$0xf] %v315
    %348 = vst [vmem:[#allocation7 + $0x3c] sm:$0xf] %v316
    // Predicated region
    $region22: #{tpu_custom_call.1} parent=1 // pred_check
      _
    $region23: #{tpu_custom_call.1} parent=1 // pred_check_branch
      %350 = sbr.rel (0) target = $region25
    $region24: #{tpu_custom_call.1} parent=1 // pred_region
      %s352 = ssub.s32 1024, 1024
      %353 = vsyncadd [#allocation4], %s352
      %s354 = sshll.u32 [#allocation7], 4
      %s355 = int_to_ptr.vmem [resolvable:$true] %s354
      %360 = dma.vmem_to_hbm [thread:$0]  %s355, 1024, %s3, [#allocation4], 64, 64, 4
    $region25: #{tpu_custom_call.1} parent=1 // pred_fallthru
      _
    // Predicated region
    $region26: #{tpu_custom_call.1} parent=1 // pred_check
      _
    $region27: #{tpu_custom_call.1} parent=1 // pred_check_branch
      %362 = sbr.rel (0) target = $region29
    $region28: #{tpu_custom_call.1} parent=1 // pred_region
      %363 = dma.done [#allocation4], 1024
    $region29: #{tpu_custom_call.1} parent=1 // pred_fallthru
      _
    %364 = vsyncpa [#allocation3], 1
    %365 = vsyncpa [#allocation6], 1
    %366 = vsyncpa [#allocation4], 1

</llo_original>
